<compile_context>
chip_gen: v5e
topology: v5e:2x2
jax: 0.10.0
libtpu: 0.0.40
codegen_flags: <defaults>
</compile_context>

<pallas_src>
import jax
import jax.numpy as jnp
from jax import lax
from jax.experimental import pallas as pl
from jax.experimental.pallas import tpu as pltpu


def _mha_kernel(x_ref, wqkv_ref, wp_ref, b_ref, out_ref, aff_ref):
    """Single-step fused multi-head attention.

    x_ref    : [T, C]
    wqkv_ref : [C, 3*H]    packed [Wq | Wk | Wv], scale folded into Wq
    wp_ref   : [H, C]      concat of per-head output-projection slices
    b_ref    : [1, C]
    out_ref  : [T, C]
    aff_ref  : [n_head, T] pre-softmax scaled affinities, query row 1, per head
    """
    n_head, T = aff_ref.shape
    H = wp_ref.shape[0]
    hs = H // n_head

    x = x_ref[...]                                                    # [T, C]

    # One packed projection matmul instead of 3 * n_head tiny ones.
    qkv = jnp.dot(x, wqkv_ref[...], preferred_element_type=jnp.float32)  # [T, 3H]
    q = qkv[:, :H]
    k = qkv[:, H:2 * H]
    v = qkv[:, 2 * H:]

    # Per-head scores (scale already folded into Wq), stacked along sublanes
    # so the softmax below runs once over all heads.
    score_blocks = []
    aff_rows = []
    for h in range(n_head):                       # static unroll (n_head small)
        sl = slice(h * hs, (h + 1) * hs)
        # scores_h = q_h @ k_h^T without materializing a transpose.
        s_h = lax.dot_general(
            q[:, sl], k[:, sl], (((1,), (1,)), ((), ())),
            preferred_element_type=jnp.float32)                       # [T, T]
        score_blocks.append(s_h)
        # obj_affinities taken BEFORE the softmax (matches PyTorch code).
        aff_rows.append(s_h[1:2, :])

    scores_all = jnp.concatenate(score_blocks, axis=0)                # [nH*T, T]

    # Numerically stable row softmax, batched over all heads; reciprocal on
    # the EUP slot.
    m = jnp.max(scores_all, axis=-1, keepdims=True)
    e = jnp.exp(scores_all - m)
    p_all = e * pl.reciprocal(jnp.sum(e, axis=-1, keepdims=True), approx=True)

    # Per-head weighted sums of V (T-aligned sublane slices of p_all).
    head_outs = []
    for h in range(n_head):
        p_h = p_all[h * T:(h + 1) * T, :]                             # [T, T]
        v_h = v[:, h * hs:(h + 1) * hs]                               # [T, hs]
        head_outs.append(jnp.dot(p_h, v_h,
                                 preferred_element_type=jnp.float32))  # [T, hs]

    # concat(heads) @ Wproj + bias as one matmul, single store of the output.
    head_cat = jnp.concatenate(head_outs, axis=-1)                    # [T, H]
    out_ref[...] = b_ref[...] + jnp.dot(head_cat, wp_ref[...],
                                        preferred_element_type=jnp.float32)

    # Affinity slab written once.
    aff_ref[...] = jnp.concatenate(aff_rows, axis=0)                  # [n_head, T]


@jax.jit
def multi_head_attention(x, wq, wk, wv, wp, b):
    """x: [T, C]; wq/wk/wv: [n_head, C, hs]; wp: [n_head, hs, C]; b: [1, C].

    Returns (out [T, C], obj_affinities [n_head, T]).
    """
    T, C = x.shape
    n_head, _, hs = wq.shape
    H = n_head * hs

    # --- wrapper-side weight packing (done once, outside the kernel) ---
    scale = float(hs) ** (-0.5)
    wq_flat = jnp.transpose(wq * scale, (1, 0, 2)).reshape(C, H)   # scale folded
    wk_flat = jnp.transpose(wk, (1, 0, 2)).reshape(C, H)
    wv_flat = jnp.transpose(wv, (1, 0, 2)).reshape(C, H)
    wqkv = jnp.concatenate([wq_flat, wk_flat, wv_flat], axis=1)    # [C, 3H]
    wp_flat = wp.reshape(H, C)                                     # [H, C]

    out_shapes = (
        jax.ShapeDtypeStruct((T, C), jnp.float32),        # projected output
        jax.ShapeDtypeStruct((n_head, T), jnp.float32),   # obj affinities
    )

    grid_spec = pltpu.PrefetchScalarGridSpec(
        num_scalar_prefetch=0,
        grid=(1,),
        in_specs=[
            pl.BlockSpec((T, C), lambda i: (0, 0)),        # x
            pl.BlockSpec((C, 3 * H), lambda i: (0, 0)),    # packed Wqkv
            pl.BlockSpec((H, C), lambda i: (0, 0)),        # Wproj
            pl.BlockSpec((1, C), lambda i: (0, 0)),        # proj bias
        ],
        out_specs=[
            pl.BlockSpec((T, C), lambda i: (0, 0)),
            pl.BlockSpec((n_head, T), lambda i: (0, 0)),
        ],
    )

    return pl.pallas_call(
        _mha_kernel,
        out_shape=out_shapes,
        grid_spec=grid_spec,
        compiler_params=pltpu.CompilerParams(
            dimension_semantics=("arbitrary",)),
    )(x, wqkv, wp_flat, b)


def _reference(x, wq, wk, wv, wp, b):
    """Pure-JAX reference mirroring the PyTorch forward (dropout = identity)."""
    n_head = wq.shape[0]
    hs = wq.shape[-1]
    outs, affs = [], []
    for h in range(n_head):
        q = x @ wq[h]
        k = x @ wk[h]
        v = x @ wv[h]
        scores = (q @ k.T) * (hs ** -0.5)
        affs.append(scores[1, :])
        p = jax.nn.softmax(scores, axis=-1)
        outs.append(p @ v)
    cat = jnp.concatenate(outs, axis=-1)
    wp_full = jnp.concatenate([wp[h] for h in range(n_head)], axis=0)  # [H, C]
    out = cat @ wp_full + b
    return out, jnp.stack(affs, axis=0)


if __name__ == "__main__":
    T, C, n_head = 8, 32, 4
    hs = C // n_head

    key = jax.random.PRNGKey(0)
    kx, kq, kk, kv, kp, kb = jax.random.split(key, 6)

    x = jax.random.normal(kx, (T, C), dtype=jnp.float32)
    # Per-head projection weights, stored pre-transposed: [n_head, C, hs].
    wq = 0.1 * jax.random.normal(kq, (n_head, C, hs), dtype=jnp.float32)
    wk = 0.1 * jax.random.normal(kk, (n_head, C, hs), dtype=jnp.float32)
    wv = 0.1 * jax.random.normal(kv, (n_head, C, hs), dtype=jnp.float32)
    # Output projection nn.Linear(n_head*hs, C): stored per-head, transposed:
    # wp[h] = W[:, h*hs:(h+1)*hs].T  -> [hs, C].
    wp = 0.1 * jax.random.normal(kp, (n_head, hs, C), dtype=jnp.float32)
    b = 0.1 * jax.random.normal(kb, (1, C), dtype=jnp.float32)

    out, affs = multi_head_attention(x, wq, wk, wv, wp, b)
    jax.block_until_ready((out, affs))

    ref_out, ref_affs = _reference(x, wq, wk, wv, wp, b)
    assert out.shape == (T, C)
    assert affs.shape == (n_head, T)
    # Output tolerance slightly relaxed for the EUP approx-reciprocal softmax.
    assert jnp.allclose(out, ref_out, atol=1e-3, rtol=1e-3)
    # Affinities are pre-softmax (no reciprocal involved): tight tolerance.
    assert jnp.allclose(affs, ref_affs, atol=1e-4, rtol=1e-4)

    print("KERNEL_OK")
</pallas_src>

<mosaic_0001>
module attributes {stable_mosaic.version = 11 : i64} {
  func.func @_mha_kernel(%arg0: i32, %arg1: memref<8x32xf32, #tpu.memory_space<vmem>>, %arg2: memref<32x96xf32, #tpu.memory_space<vmem>>, %arg3: memref<32x32xf32, #tpu.memory_space<vmem>>, %arg4: memref<1x32xf32, #tpu.memory_space<vmem>>, %arg5: memref<8x32xf32, #tpu.memory_space<vmem>>, %arg6: memref<4x8xf32, #tpu.memory_space<vmem>>) attributes {dimension_semantics = [#tpu.dimension_semantics<arbitrary>], iteration_bounds = array<i64: 1>, scalar_prefetch = 0 : i64, scratch_operands = 0 : i64, tpu.core_type = #tpu.core_type<tc>, window_params = [{pipeline_mode = #tpu.pipeline_mode<synchronous>, transform_indices = @transform_0, window_bounds = array<i64: 8, 32>}, {pipeline_mode = #tpu.pipeline_mode<synchronous>, transform_indices = @transform_1, window_bounds = array<i64: 32, 96>}, {pipeline_mode = #tpu.pipeline_mode<synchronous>, transform_indices = @transform_2, window_bounds = array<i64: 32, 32>}, {pipeline_mode = #tpu.pipeline_mode<synchronous>, transform_indices = @transform_3, window_bounds = array<i64: 1, 32>}, {pipeline_mode = #tpu.pipeline_mode<synchronous>, transform_indices = @transform_4, window_bounds = array<i64: 8, 32>}, {pipeline_mode = #tpu.pipeline_mode<synchronous>, transform_indices = @transform_5, window_bounds = array<i64: 4, 8>}]} {
    %c0 = arith.constant 0 : index
    %c0_0 = arith.constant 0 : index
    %0 = vector.load %arg1[%c0, %c0_0] : memref<8x32xf32, #tpu.memory_space<vmem>>, vector<8x32xf32>
    %c0_1 = arith.constant 0 : index
    %c0_2 = arith.constant 0 : index
    %1 = vector.load %arg2[%c0_1, %c0_2] : memref<32x96xf32, #tpu.memory_space<vmem>>, vector<32x96xf32>
    %cst = arith.constant dense<0.000000e+00> : vector<8x96xf32>
    %2 = tpu.matmul %0, %1, %cst {dimension_numbers = #tpu.dot_dimension_numbers<[1], [0], [0], [1], [0, 0, 1, 1], [], []>} : vector<8x32xf32>, vector<32x96xf32>, vector<8x96xf32> -> vector<8x96xf32>
    %3 = vector.extract_strided_slice %2 {offsets = [0, 0], sizes = [8, 32], strides = [1, 1]} : vector<8x96xf32> to vector<8x32xf32>
    %4 = vector.extract_strided_slice %2 {offsets = [0, 32], sizes = [8, 32], strides = [1, 1]} : vector<8x96xf32> to vector<8x32xf32>
    %5 = vector.extract_strided_slice %2 {offsets = [0, 64], sizes = [8, 32], strides = [1, 1]} : vector<8x96xf32> to vector<8x32xf32>
    %6 = vector.extract_strided_slice %3 {offsets = [0, 0], sizes = [8, 8], strides = [1, 1]} : vector<8x32xf32> to vector<8x8xf32>
    %7 = vector.extract_strided_slice %4 {offsets = [0, 0], sizes = [8, 8], strides = [1, 1]} : vector<8x32xf32> to vector<8x8xf32>
    %cst_3 = arith.constant dense<0.000000e+00> : vector<8x8xf32>
    %8 = tpu.matmul %6, %7, %cst_3 {dimension_numbers = #tpu.dot_dimension_numbers<[1], [1], [0], [0], [0, 0, 1, 0], [], []>} : vector<8x8xf32>, vector<8x8xf32>, vector<8x8xf32> -> vector<8x8xf32>
    %9 = vector.extract_strided_slice %8 {offsets = [1, 0], sizes = [1, 8], strides = [1, 1]} : vector<8x8xf32> to vector<1x8xf32>
    %10 = vector.extract_strided_slice %3 {offsets = [0, 8], sizes = [8, 8], strides = [1, 1]} : vector<8x32xf32> to vector<8x8xf32>
    %11 = vector.extract_strided_slice %4 {offsets = [0, 8], sizes = [8, 8], strides = [1, 1]} : vector<8x32xf32> to vector<8x8xf32>
    %cst_4 = arith.constant dense<0.000000e+00> : vector<8x8xf32>
    %12 = tpu.matmul %10, %11, %cst_4 {dimension_numbers = #tpu.dot_dimension_numbers<[1], [1], [0], [0], [0, 0, 1, 0], [], []>} : vector<8x8xf32>, vector<8x8xf32>, vector<8x8xf32> -> vector<8x8xf32>
    %13 = vector.extract_strided_slice %12 {offsets = [1, 0], sizes = [1, 8], strides = [1, 1]} : vector<8x8xf32> to vector<1x8xf32>
    %14 = vector.extract_strided_slice %3 {offsets = [0, 16], sizes = [8, 8], strides = [1, 1]} : vector<8x32xf32> to vector<8x8xf32>
    %15 = vector.extract_strided_slice %4 {offsets = [0, 16], sizes = [8, 8], strides = [1, 1]} : vector<8x32xf32> to vector<8x8xf32>
    %cst_5 = arith.constant dense<0.000000e+00> : vector<8x8xf32>
    %16 = tpu.matmul %14, %15, %cst_5 {dimension_numbers = #tpu.dot_dimension_numbers<[1], [1], [0], [0], [0, 0, 1, 0], [], []>} : vector<8x8xf32>, vector<8x8xf32>, vector<8x8xf32> -> vector<8x8xf32>
    %17 = vector.extract_strided_slice %16 {offsets = [1, 0], sizes = [1, 8], strides = [1, 1]} : vector<8x8xf32> to vector<1x8xf32>
    %18 = vector.extract_strided_slice %3 {offsets = [0, 24], sizes = [8, 8], strides = [1, 1]} : vector<8x32xf32> to vector<8x8xf32>
    %19 = vector.extract_strided_slice %4 {offsets = [0, 24], sizes = [8, 8], strides = [1, 1]} : vector<8x32xf32> to vector<8x8xf32>
    %cst_6 = arith.constant dense<0.000000e+00> : vector<8x8xf32>
    %20 = tpu.matmul %18, %19, %cst_6 {dimension_numbers = #tpu.dot_dimension_numbers<[1], [1], [0], [0], [0, 0, 1, 0], [], []>} : vector<8x8xf32>, vector<8x8xf32>, vector<8x8xf32> -> vector<8x8xf32>
    %21 = vector.extract_strided_slice %20 {offsets = [1, 0], sizes = [1, 8], strides = [1, 1]} : vector<8x8xf32> to vector<1x8xf32>
    %22 = tpu.concatenate %8, %12, %16, %20 in 0 : vector<8x8xf32>, vector<8x8xf32>, vector<8x8xf32>, vector<8x8xf32> -> vector<32x8xf32>
    %cst_7 = arith.constant dense<0xFF800000> : vector<32xf32>
    %23 = vector.multi_reduction <maximumf>, %22, %cst_7 [1] : vector<32x8xf32> to vector<32xf32>
    %24 = vector.shape_cast %23 : vector<32xf32> to vector<32x1xf32>
    %25 = vector.broadcast %24 : vector<32x1xf32> to vector<32x8xf32>
    %26 = arith.subf %22, %25 : vector<32x8xf32>
    %27 = math.exp %26 : vector<32x8xf32>
    %cst_8 = arith.constant dense<0.000000e+00> : vector<32xf32>
    %28 = vector.multi_reduction <add>, %27, %cst_8 [1] : vector<32x8xf32> to vector<32xf32>
    %29 = vector.shape_cast %28 : vector<32xf32> to vector<32x1xf32>
    %30 = tpu.reciprocal %29 {approx = true} : vector<32x1xf32> -> vector<32x1xf32>
    %31 = vector.broadcast %30 : vector<32x1xf32> to vector<32x8xf32>
    %32 = arith.mulf %27, %31 : vector<32x8xf32>
    %33 = vector.extract_strided_slice %32 {offsets = [0, 0], sizes = [8, 8], strides = [1, 1]} : vector<32x8xf32> to vector<8x8xf32>
    %34 = vector.extract_strided_slice %5 {offsets = [0, 0], sizes = [8, 8], strides = [1, 1]} : vector<8x32xf32> to vector<8x8xf32>
    %cst_9 = arith.constant dense<0.000000e+00> : vector<8x8xf32>
    %35 = tpu.matmul %33, %34, %cst_9 {dimension_numbers = #tpu.dot_dimension_numbers<[1], [0], [0], [1], [0, 0, 1, 1], [], []>} : vector<8x8xf32>, vector<8x8xf32>, vector<8x8xf32> -> vector<8x8xf32>
    %36 = vector.extract_strided_slice %32 {offsets = [8, 0], sizes = [8, 8], strides = [1, 1]} : vector<32x8xf32> to vector<8x8xf32>
    %37 = vector.extract_strided_slice %5 {offsets = [0, 8], sizes = [8, 8], strides = [1, 1]} : vector<8x32xf32> to vector<8x8xf32>
    %cst_10 = arith.constant dense<0.000000e+00> : vector<8x8xf32>
    %38 = tpu.matmul %36, %37, %cst_10 {dimension_numbers = #tpu.dot_dimension_numbers<[1], [0], [0], [1], [0, 0, 1, 1], [], []>} : vector<8x8xf32>, vector<8x8xf32>, vector<8x8xf32> -> vector<8x8xf32>
    %39 = vector.extract_strided_slice %32 {offsets = [16, 0], sizes = [8, 8], strides = [1, 1]} : vector<32x8xf32> to vector<8x8xf32>
    %40 = vector.extract_strided_slice %5 {offsets = [0, 16], sizes = [8, 8], strides = [1, 1]} : vector<8x32xf32> to vector<8x8xf32>
    %cst_11 = arith.constant dense<0.000000e+00> : vector<8x8xf32>
    %41 = tpu.matmul %39, %40, %cst_11 {dimension_numbers = #tpu.dot_dimension_numbers<[1], [0], [0], [1], [0, 0, 1, 1], [], []>} : vector<8x8xf32>, vector<8x8xf32>, vector<8x8xf32> -> vector<8x8xf32>
    %42 = vector.extract_strided_slice %32 {offsets = [24, 0], sizes = [8, 8], strides = [1, 1]} : vector<32x8xf32> to vector<8x8xf32>
    %43 = vector.extract_strided_slice %5 {offsets = [0, 24], sizes = [8, 8], strides = [1, 1]} : vector<8x32xf32> to vector<8x8xf32>
    %cst_12 = arith.constant dense<0.000000e+00> : vector<8x8xf32>
    %44 = tpu.matmul %42, %43, %cst_12 {dimension_numbers = #tpu.dot_dimension_numbers<[1], [0], [0], [1], [0, 0, 1, 1], [], []>} : vector<8x8xf32>, vector<8x8xf32>, vector<8x8xf32> -> vector<8x8xf32>
    %45 = tpu.concatenate %35, %38, %41, %44 in 1 : vector<8x8xf32>, vector<8x8xf32>, vector<8x8xf32>, vector<8x8xf32> -> vector<8x32xf32>
    %c0_13 = arith.constant 0 : index
    %c0_14 = arith.constant 0 : index
    %46 = vector.load %arg4[%c0_13, %c0_14] : memref<1x32xf32, #tpu.memory_space<vmem>>, vector<1x32xf32>
    %c0_15 = arith.constant 0 : index
    %c0_16 = arith.constant 0 : index
    %47 = vector.load %arg3[%c0_15, %c0_16] : memref<32x32xf32, #tpu.memory_space<vmem>>, vector<32x32xf32>
    %cst_17 = arith.constant dense<0.000000e+00> : vector<8x32xf32>
    %48 = tpu.matmul %45, %47, %cst_17 {dimension_numbers = #tpu.dot_dimension_numbers<[1], [0], [0], [1], [0, 0, 1, 1], [], []>} : vector<8x32xf32>, vector<32x32xf32>, vector<8x32xf32> -> vector<8x32xf32>
    %49 = vector.broadcast %46 : vector<1x32xf32> to vector<8x32xf32>
    %50 = arith.addf %49, %48 : vector<8x32xf32>
    %c0_18 = arith.constant 0 : index
    %c0_19 = arith.constant 0 : index
    %51 = vector.load %arg5[%c0_18, %c0_19] : memref<8x32xf32, #tpu.memory_space<vmem>>, vector<8x32xf32>
    tpu.vector_store %arg5[%c0_18, %c0_19], %50 {strides = array<i32>} : memref<8x32xf32, #tpu.memory_space<vmem>>, vector<8x32xf32>,
    %52 = tpu.concatenate %9, %13, %17, %21 in 0 : vector<1x8xf32>, vector<1x8xf32>, vector<1x8xf32>, vector<1x8xf32> -> vector<4x8xf32>
    %c0_20 = arith.constant 0 : index
    %c0_21 = arith.constant 0 : index
    %53 = vector.load %arg6[%c0_20, %c0_21] : memref<4x8xf32, #tpu.memory_space<vmem>>, vector<4x8xf32>
    tpu.vector_store %arg6[%c0_20, %c0_21], %52 {strides = array<i32>} : memref<4x8xf32, #tpu.memory_space<vmem>>, vector<4x8xf32>,
    return
  }
  func.func @transform_0(%arg0: i32) -> (i32, i32) {
    %c0_i32 = arith.constant 0 : i32
    %c0_i32_0 = arith.constant 0 : i32
    %c0_i32_1 = arith.constant 0 : i32
    return %c0_i32, %c0_i32_0 : i32, i32
  }
  func.func @transform_1(%arg0: i32) -> (i32, i32) {
    %c0_i32 = arith.constant 0 : i32
    %c0_i32_0 = arith.constant 0 : i32
    %c0_i32_1 = arith.constant 0 : i32
    return %c0_i32, %c0_i32_0 : i32, i32
  }
  func.func @transform_2(%arg0: i32) -> (i32, i32) {
    %c0_i32 = arith.constant 0 : i32
    %c0_i32_0 = arith.constant 0 : i32
    %c0_i32_1 = arith.constant 0 : i32
    return %c0_i32, %c0_i32_0 : i32, i32
  }
  func.func @transform_3(%arg0: i32) -> (i32, i32) {
    %c0_i32 = arith.constant 0 : i32
    %c0_i32_0 = arith.constant 0 : i32
    %c0_i32_1 = arith.constant 0 : i32
    return %c0_i32, %c0_i32_0 : i32, i32
  }
  func.func @transform_4(%arg0: i32) -> (i32, i32) {
    %c0_i32 = arith.constant 0 : i32
    %c0_i32_0 = arith.constant 0 : i32
    %c0_i32_1 = arith.constant 0 : i32
    return %c0_i32, %c0_i32_0 : i32, i32
  }
  func.func @transform_5(%arg0: i32) -> (i32, i32) {
    %c0_i32 = arith.constant 0 : i32
    %c0_i32_0 = arith.constant 0 : i32
    %c0_i32_1 = arith.constant 0 : i32
    return %c0_i32, %c0_i32_0 : i32, i32
  }
}

</mosaic_0001>

<llo_original>
// kernel: multi_head_attention.1
$region0: #{multi_head_attention.1}
  #allocation0 [shape = 'u32[]', space=smem, size = 0x4, offset = 0x4, fixed_abs, tag = 'smem constant byte address 0x4 - core index']
  #allocation1 [shape = 'u32[72,128]{1,0:T(1,128)}', space=vmem, size = 0x9000, scoped, tag = 'internal scratch']
  %s0 = inlined_call_operand.vmem [shape: f32[8,32], index: 0, kind: input, shape index: {}]
  %s1 = inlined_call_operand.vmem [shape: f32[32,96], index: 1, kind: input, shape index: {}]
  %s2 = inlined_call_operand.vmem [shape: f32[32,32], index: 2, kind: input, shape index: {}]
  %s3 = inlined_call_operand.vmem [shape: f32[1,32], index: 3, kind: input, shape index: {}]
  %s4 = inlined_call_operand.hbm [shape: f32[8,32], index: 4, kind: output, shape index: {0}]
  %s5 = inlined_call_operand.hbm [shape: f32[4,8], index: 5, kind: output, shape index: {1}]
  %6 = xla_tuple %s4, %s5
  %s7 = sld [smem:[#allocation0]]
  $region34: #{multi_head_attention.1} parent=0
    _
  %s9 = ssub.s32 1, %s7
  %s10 = scalar_select 0, %s9, %s7
  $region1: #{multi_head_attention.1} parent=0
    #allocation2 [shape = 'u8[4096]{0}', space=vmem, size = 0x1000, scoped, tag = 'output window, operand 0, single buffered']
    #allocation3 [shape = 's32[1]{0}', space=sflag, size = 0x4, scoped, tag = 'scoped memory for multi_head_attention.1']
    #allocation4 [shape = 'u8[2048]{0}', space=vmem, size = 0x800, scoped, tag = 'output window, operand 1, single buffered']
    #allocation5 [shape = 's32[1]{0}', space=sflag, size = 0x4, scoped, tag = 'scoped memory for multi_head_attention.1']
    %11 = vsyncpa [#allocation3], 0
    %12 = vsyncpa [#allocation5], 0
    // Predicated region
    $region2: #{multi_head_attention.1} parent=1 // pred_check
      _
    $region3: #{multi_head_attention.1} parent=1 // pred_check_branch
      %14 = sbr.rel (0) target = $region5
    $region4: #{multi_head_attention.1} parent=1 // pred_region
      _
    $region5: #{multi_head_attention.1} parent=1 // pred_fallthru
      _
    // Predicated region
    $region6: #{multi_head_attention.1} parent=1 // pred_check
      _
    $region7: #{multi_head_attention.1} parent=1 // pred_check_branch
      %16 = sbr.rel (0) target = $region9
    $region8: #{multi_head_attention.1} parent=1 // pred_region
      _
    $region9: #{multi_head_attention.1} parent=1 // pred_fallthru
      _
    // Predicated region
    $region10: #{multi_head_attention.1} parent=1 // pred_check
      _
    $region11: #{multi_head_attention.1} parent=1 // pred_check_branch
      %18 = sbr.rel (0) target = $region13
    $region12: #{multi_head_attention.1} parent=1 // pred_region
      _
    $region13: #{multi_head_attention.1} parent=1 // pred_fallthru
      _
    // Predicated region
    $region14: #{multi_head_attention.1} parent=1 // pred_check
      _
    $region15: #{multi_head_attention.1} parent=1 // pred_check_branch
      %20 = sbr.rel (0) target = $region17
    $region16: #{multi_head_attention.1} parent=1 // pred_region
      _
    $region17: #{multi_head_attention.1} parent=1 // pred_fallthru
      _
    %v21 = vld [vmem:[%s0] sm:$0xff]
    %v22 = vld [vmem:[%s1] sm:$0xff]
    %v23 = vld [vmem:[%s1 + $0x8] sm:$0xff]
    %v24 = vld [vmem:[%s1 + $0x10] sm:$0xff]
    %v25 = vld [vmem:[%s1 + $0x18] sm:$0xff]
    %vm26 = vcmask 261120
    %v28 = vsel %vm26, %v21, 0
    %30 = vmatpush.msra.mxu0 0.0
    %31 = vmatpush.msra.mxu0 0.0
    %32 = vmatpush.msra.mxu0 0.0
    %33 = vmatpush.msra.mxu0 0.0
    %34 = vmatpush.msra.mxu0 0.0
    %35 = vmatpush.msra.mxu0 0.0
    %36 = vmatpush.msra.mxu0 0.0
    %37 = vmatpush.msra.mxu0 0.0
    %38 = vmatpush.msra.mxu0 0.0
    %39 = vmatpush.msra.mxu0 0.0
    %40 = vmatpush.msra.mxu0 0.0
    %41 = vmatpush.msra.mxu0 0.0
    %42 = vmatpush.msra.mxu0 %v25
    %43 = vmatpush.msra.mxu0 %v24
    %44 = vmatpush.msra.mxu0 %v23
    %45 = vmatpush.msra.mxu0 %v22
    %46 = vmatmul.f32.gmra.mxu0 %v28
    %v47 = vpop.f32.mrf.mxu0
    %v48 = vadd.f32 0.0, %v47
    %49 = vdwg.mxu0
    %51 = vrot.lane.b32.xlu0 %v48, 96
    %v52 = vpop.permute.xlu0 %51
    %vm53 = vcmask 64512
    %v54 = vsel %vm53, %v48, 0
    %v56 = vsel %vm53, %v52, 0
    %58 = vmatpush.xpose.msra.mxu0 0.0
    %59 = vmatpush.xpose.msra.mxu0 0.0
    %60 = vmatpush.xpose.msra.mxu0 0.0
    %61 = vmatpush.xpose.msra.mxu0 0.0
    %62 = vmatpush.xpose.msra.mxu0 0.0
    %63 = vmatpush.xpose.msra.mxu0 0.0
    %64 = vmatpush.xpose.msra.mxu0 0.0
    %65 = vmatpush.xpose.msra.mxu0 0.0
    %66 = vmatpush.xpose.msra.mxu0 0.0
    %67 = vmatpush.xpose.msra.mxu0 0.0
    %68 = vmatpush.xpose.msra.mxu0 0.0
    %69 = vmatpush.xpose.msra.mxu0 0.0
    %70 = vmatpush.xpose.msra.mxu0 0.0
    %71 = vmatpush.xpose.msra.mxu0 0.0
    %72 = vmatpush.xpose.msra.mxu0 0.0
    %73 = vmatpush.xpose.msra.mxu0 %v56
    %74 = vmatmul.f32.gmra.mxu0 %v54
    %v75 = vpop.f32.mrf.mxu0
    %v76 = vadd.f32 0.0, %v75
    %77 = vdwg.mxu0
    %78 = vrot.lane.b32.xlu0 %v48, 120
    %v79 = vpop.permute.xlu0 %78
    %80 = vrot.lane.b32.xlu0 %v48, 88
    %v81 = vpop.permute.xlu0 %80
    %v82 = vsel %vm53, %v79, 0
    %v84 = vsel %vm53, %v81, 0
    %86 = vmatpush.xpose.msra.mxu0 0.0
    %87 = vmatpush.xpose.msra.mxu0 0.0
    %88 = vmatpush.xpose.msra.mxu0 0.0
    %89 = vmatpush.xpose.msra.mxu0 0.0
    %90 = vmatpush.xpose.msra.mxu0 0.0
    %91 = vmatpush.xpose.msra.mxu0 0.0
    %92 = vmatpush.xpose.msra.mxu0 0.0
    %93 = vmatpush.xpose.msra.mxu0 0.0
    %94 = vmatpush.xpose.msra.mxu0 0.0
    %95 = vmatpush.xpose.msra.mxu0 0.0
    %96 = vmatpush.xpose.msra.mxu0 0.0
    %97 = vmatpush.xpose.msra.mxu0 0.0
    %98 = vmatpush.xpose.msra.mxu0 0.0
    %99 = vmatpush.xpose.msra.mxu0 0.0
    %100 = vmatpush.xpose.msra.mxu0 0.0
    %101 = vmatpush.xpose.msra.mxu0 %v84
    %102 = vmatmul.f32.gmra.mxu0 %v82
    %v103 = vpop.f32.mrf.mxu0
    %v104 = vadd.f32 0.0, %v103
    %105 = vdwg.mxu0
    %106 = vrot.lane.b32.xlu0 %v48, 112
    %v107 = vpop.permute.xlu0 %106
    %108 = vrot.lane.b32.xlu0 %v48, 80
    %v109 = vpop.permute.xlu0 %108
    %v110 = vsel %vm53, %v107, 0
    %v112 = vsel %vm53, %v109, 0
    %114 = vmatpush.xpose.msra.mxu0 0.0
    %115 = vmatpush.xpose.msra.mxu0 0.0
    %116 = vmatpush.xpose.msra.mxu0 0.0
    %117 = vmatpush.xpose.msra.mxu0 0.0
    %118 = vmatpush.xpose.msra.mxu0 0.0
    %119 = vmatpush.xpose.msra.mxu0 0.0
    %120 = vmatpush.xpose.msra.mxu0 0.0
    %121 = vmatpush.xpose.msra.mxu0 0.0
    %122 = vmatpush.xpose.msra.mxu0 0.0
    %123 = vmatpush.xpose.msra.mxu0 0.0
    %124 = vmatpush.xpose.msra.mxu0 0.0
    %125 = vmatpush.xpose.msra.mxu0 0.0
    %126 = vmatpush.xpose.msra.mxu0 0.0
    %127 = vmatpush.xpose.msra.mxu0 0.0
    %128 = vmatpush.xpose.msra.mxu0 0.0
    %129 = vmatpush.xpose.msra.mxu0 %v112
    %130 = vmatmul.f32.gmra.mxu0 %v110
    %v131 = vpop.f32.mrf.mxu0
    %v132 = vadd.f32 0.0, %v131
    %133 = vdwg.mxu0
    %134 = vrot.lane.b32.xlu0 %v48, 104
    %v135 = vpop.permute.xlu0 %134
    %136 = vrot.lane.b32.xlu0 %v48, 72
    %v137 = vpop.permute.xlu0 %136
    %v138 = vsel %vm53, %v135, 0
    %v140 = vsel %vm53, %v137, 0
    %142 = vmatpush.xpose.msra.mxu0 0.0
    %143 = vmatpush.xpose.msra.mxu0 0.0
    %144 = vmatpush.xpose.msra.mxu0 0.0
    %145 = vmatpush.xpose.msra.mxu0 0.0
    %146 = vmatpush.xpose.msra.mxu0 0.0
    %147 = vmatpush.xpose.msra.mxu0 0.0
    %148 = vmatpush.xpose.msra.mxu0 0.0
    %149 = vmatpush.xpose.msra.mxu0 0.0
    %150 = vmatpush.xpose.msra.mxu0 0.0
    %151 = vmatpush.xpose.msra.mxu0 0.0
    %152 = vmatpush.xpose.msra.mxu0 0.0
    %153 = vmatpush.xpose.msra.mxu0 0.0
    %154 = vmatpush.xpose.msra.mxu0 0.0
    %155 = vmatpush.xpose.msra.mxu0 0.0
    %156 = vmatpush.xpose.msra.mxu0 0.0
    %157 = vmatpush.xpose.msra.mxu0 %v140
    %158 = vmatmul.f32.gmra.mxu0 %v138
    %v159 = vpop.f32.mrf.mxu0
    %v160 = vadd.f32 0.0, %v159
    %161 = vdwg.mxu0
    %v162 = vsel %vm53, %v76, -inf
    %163 = vmax.xlane.f32.xlu0 %v162
    %v164 = vpop.xlane.xlu0 %163
    %v165 = vsel %vm53, %v104, -inf
    %166 = vmax.xlane.f32.xlu0 %v165
    %v167 = vpop.xlane.xlu0 %166
    %v168 = vsel %vm53, %v132, -inf
    %169 = vmax.xlane.f32.xlu0 %v168
    %v170 = vpop.xlane.xlu0 %169
    %v171 = vsel %vm53, %v160, -inf
    %172 = vmax.xlane.f32.xlu0 %v171
    %v173 = vpop.xlane.xlu0 %172
    %v174 = vsub.f32 %v76, %v164
    %v175 = vsub.f32 %v104, %v167
    %v176 = vsub.f32 %v132, %v170
    %v177 = vsub.f32 %v160, %v173
    %v178 = vmul.f32 %v174, 1.442695
    %v179 = vpow.pop %v178
    %v180 = vmul.f32 %v175, 1.442695
    %v181 = vpow.pop %v180
    %v182 = vmul.f32 %v176, 1.442695
    %v183 = vpow.pop %v182
    %v184 = vmul.f32 %v177, 1.442695
    %v185 = vpow.pop %v184
    %v186 = vsel %vm53, %v179, 0.0
    %187 = vadd.xlane.f32.xlu0 %v186
    %v188 = vpop.xlane.xlu0 %187
    %v189 = vsel %vm53, %v181, 0.0
    %190 = vadd.xlane.f32.xlu0 %v189
    %v191 = vpop.xlane.xlu0 %190
    %v192 = vsel %vm53, %v183, 0.0
    %193 = vadd.xlane.f32.xlu0 %v192
    %v194 = vpop.xlane.xlu0 %193
    %v195 = vsel %vm53, %v185, 0.0
    %196 = vadd.xlane.f32.xlu0 %v195
    %v197 = vpop.xlane.xlu0 %196
    %v198 = vrcp.pop %v188
    %v199 = vrcp.pop %v191
    %v200 = vrcp.pop %v194
    %v201 = vrcp.pop %v197
    %v202 = vmul.f32 %v179, %v198
    %v203 = vmul.f32 %v181, %v199
    %v204 = vmul.f32 %v183, %v200
    %v205 = vmul.f32 %v185, %v201
    %206 = vrot.lane.b32.xlu0 %v48, 64
    %v207 = vpop.permute.xlu0 %206
    %v210 = vsel %vm53, %v202, 0
    %212 = vmatpush.msra.mxu0 0.0
    %213 = vmatpush.msra.mxu0 0.0
    %214 = vmatpush.msra.mxu0 0.0
    %215 = vmatpush.msra.mxu0 0.0
    %216 = vmatpush.msra.mxu0 0.0
    %217 = vmatpush.msra.mxu0 0.0
    %218 = vmatpush.msra.mxu0 0.0
    %219 = vmatpush.msra.mxu0 0.0
    %220 = vmatpush.msra.mxu0 0.0
    %221 = vmatpush.msra.mxu0 0.0
    %222 = vmatpush.msra.mxu0 0.0
    %223 = vmatpush.msra.mxu0 0.0
    %224 = vmatpush.msra.mxu0 0.0
    %225 = vmatpush.msra.mxu0 0.0
    %226 = vmatpush.msra.mxu0 0.0
    %227 = vmatpush.msra.mxu0 %v207
    %228 = vmatmul.f32.gmra.mxu0 %v210
    %v229 = vpop.f32.mrf.mxu0
    %v230 = vadd.f32 0.0, %v229
    %231 = vdwg.mxu0
    %232 = vrot.lane.b32.xlu0 %v48, 56
    %v233 = vpop.permute.xlu0 %232
    %v236 = vsel %vm53, %v203, 0
    %238 = vmatpush.msra.mxu0 0.0
    %239 = vmatpush.msra.mxu0 0.0
    %240 = vmatpush.msra.mxu0 0.0
    %241 = vmatpush.msra.mxu0 0.0
    %242 = vmatpush.msra.mxu0 0.0
    %243 = vmatpush.msra.mxu0 0.0
    %244 = vmatpush.msra.mxu0 0.0
    %245 = vmatpush.msra.mxu0 0.0
    %246 = vmatpush.msra.mxu0 0.0
    %247 = vmatpush.msra.mxu0 0.0
    %248 = vmatpush.msra.mxu0 0.0
    %249 = vmatpush.msra.mxu0 0.0
    %250 = vmatpush.msra.mxu0 0.0
    %251 = vmatpush.msra.mxu0 0.0
    %252 = vmatpush.msra.mxu0 0.0
    %253 = vmatpush.msra.mxu0 %v233
    %254 = vmatmul.f32.gmra.mxu0 %v236
    %v255 = vpop.f32.mrf.mxu0
    %v256 = vadd.f32 0.0, %v255
    %257 = vdwg.mxu0
    %258 = vrot.lane.b32.xlu0 %v48, 48
    %v259 = vpop.permute.xlu0 %258
    %v262 = vsel %vm53, %v204, 0
    %264 = vmatpush.msra.mxu0 0.0
    %265 = vmatpush.msra.mxu0 0.0
    %266 = vmatpush.msra.mxu0 0.0
    %267 = vmatpush.msra.mxu0 0.0
    %268 = vmatpush.msra.mxu0 0.0
    %269 = vmatpush.msra.mxu0 0.0
    %270 = vmatpush.msra.mxu0 0.0
    %271 = vmatpush.msra.mxu0 0.0
    %272 = vmatpush.msra.mxu0 0.0
    %273 = vmatpush.msra.mxu0 0.0
    %274 = vmatpush.msra.mxu0 0.0
    %275 = vmatpush.msra.mxu0 0.0
    %276 = vmatpush.msra.mxu0 0.0
    %277 = vmatpush.msra.mxu0 0.0
    %278 = vmatpush.msra.mxu0 0.0
    %279 = vmatpush.msra.mxu0 %v259
    %280 = vmatmul.f32.gmra.mxu0 %v262
    %v281 = vpop.f32.mrf.mxu0
    %v282 = vadd.f32 0.0, %v281
    %283 = vdwg.mxu0
    %284 = vrot.lane.b32.xlu0 %v48, 40
    %v285 = vpop.permute.xlu0 %284
    %v288 = vsel %vm53, %v205, 0
    %290 = vmatpush.msra.mxu0 0.0
    %291 = vmatpush.msra.mxu0 0.0
    %292 = vmatpush.msra.mxu0 0.0
    %293 = vmatpush.msra.mxu0 0.0
    %294 = vmatpush.msra.mxu0 0.0
    %295 = vmatpush.msra.mxu0 0.0
    %296 = vmatpush.msra.mxu0 0.0
    %297 = vmatpush.msra.mxu0 0.0
    %298 = vmatpush.msra.mxu0 0.0
    %299 = vmatpush.msra.mxu0 0.0
    %300 = vmatpush.msra.mxu0 0.0
    %301 = vmatpush.msra.mxu0 0.0
    %302 = vmatpush.msra.mxu0 0.0
    %303 = vmatpush.msra.mxu0 0.0
    %304 = vmatpush.msra.mxu0 0.0
    %305 = vmatpush.msra.mxu0 %v285
    %306 = vmatmul.f32.gmra.mxu0 %v288
    %v307 = vpop.f32.mrf.mxu0
    %v308 = vadd.f32 0.0, %v307
    %309 = vdwg.mxu0
    %311 = vrot.lane.b32.xlu0 %v256, 8
    %v312 = vpop.permute.xlu0 %311
    %315 = vrot.lane.b32.xlu0 %v282, 16
    %v316 = vpop.permute.xlu0 %315
    %319 = vrot.lane.b32.xlu0 %v308, 24
    %v320 = vpop.permute.xlu0 %319
    %v322 = vsel %vm53, %v230, %v312
    %vm323 = vcmask 130048
    %v324 = vsel %vm323, %v322, %v316
    %vm325 = vcmask 195584
    %v326 = vsel %vm325, %v324, %v320
    %v327 = vld [vmem:[%s3] sm:$0x1]
    %v328 = vld [vmem:[%s2] sm:$0xff]
    %v329 = vld [vmem:[%s2 + $0x8] sm:$0xff]
    %v330 = vld [vmem:[%s2 + $0x10] sm:$0xff]
    %v331 = vld [vmem:[%s2 + $0x18] sm:$0xff]
    %v333 = vsel %vm26, %v326, 0
    %335 = vmatpush.msra.mxu0 0.0
    %336 = vmatpush.msra.mxu0 0.0
    %337 = vmatpush.msra.mxu0 0.0
    %338 = vmatpush.msra.mxu0 0.0
    %339 = vmatpush.msra.mxu0 0.0
    %340 = vmatpush.msra.mxu0 0.0
    %341 = vmatpush.msra.mxu0 0.0
    %342 = vmatpush.msra.mxu0 0.0
    %343 = vmatpush.msra.mxu0 0.0
    %344 = vmatpush.msra.mxu0 0.0
    %345 = vmatpush.msra.mxu0 0.0
    %346 = vmatpush.msra.mxu0 0.0
    %347 = vmatpush.msra.mxu0 %v331
    %348 = vmatpush.msra.mxu0 %v330
    %349 = vmatpush.msra.mxu0 %v329
    %350 = vmatpush.msra.mxu0 %v328
    %351 = vmatmul.f32.gmra.mxu0 %v333
    %v352 = vpop.f32.mrf.mxu0
    %v353 = vadd.f32 0.0, %v352
    %354 = vdwg.mxu0
    %v356 = vperm.slane %v327, 0
    %v358 = vadd.f32 %v356, %v353
    %359 = vst.msk [vmem:[#allocation2] sm:$0xff] %vm26, %v358
    %v361 = vrot.slane %v76, 1
    %v364 = vrot.slane %v132, 7
    %v367 = vrot.slane %v160, 6
    %vm369 = vcmask 1040384
    %v370 = vsel %vm369, %v361, %v104
    %vm371 = vcmask 1041408
    %v372 = vsel %vm371, %v370, %v364
    %vm373 = vcmask 1042432
    %v374 = vsel %vm373, %v372, %v367
    %vm375 = vcmask 60416
    %376 = vst.msk [vmem:[#allocation4] sm:$0xf] %vm375, %v374
    // Predicated region
    $region18: #{multi_head_attention.1} parent=1 // pred_check
      _
    $region19: #{multi_head_attention.1} parent=1 // pred_check_branch
      %378 = sbr.rel (0) target = $region21
    $region20: #{multi_head_attention.1} parent=1 // pred_region
      %380 = vsyncadd [#allocation3], 0
      %s382 = sshll.u32 [#allocation2], 4
      %s383 = int_to_ptr.vmem [resolvable:$true] %s382
      %s384 = sshll.u32 %s4, 4
      %s385 = int_to_ptr.hbm [resolvable:$true] %s384
      %387 = dma.vmem_to_hbm [thread:$0]  %s383, 128, %s385, [#allocation3]
    $region21: #{multi_head_attention.1} parent=1 // pred_fallthru
      _
    // Predicated region
    $region22: #{multi_head_attention.1} parent=1 // pred_check
      _
    $region23: #{multi_head_attention.1} parent=1 // pred_check_branch
      %389 = sbr.rel (0) target = $region25
    $region24: #{multi_head_attention.1} parent=1 // pred_region
      %391 = vsyncadd [#allocation5], 0
      %s393 = sshll.u32 [#allocation4], 4
      %s394 = int_to_ptr.vmem [resolvable:$true] %s393
      %s395 = sshll.u32 %s5, 4
      %s396 = int_to_ptr.hbm [resolvable:$true] %s395
      %398 = dma.vmem_to_hbm [thread:$0]  %s394, 64, %s396, [#allocation5]
    $region25: #{multi_head_attention.1} parent=1 // pred_fallthru
      _
    // Predicated region
    $region26: #{multi_head_attention.1} parent=1 // pred_check
      _
    $region27: #{multi_head_attention.1} parent=1 // pred_check_branch
      %400 = sbr.rel (0) target = $region29
    $region28: #{multi_head_attention.1} parent=1 // pred_region
      %402 = dma.done [#allocation3], 128
    $region29: #{multi_head_attention.1} parent=1 // pred_fallthru
      _
    // Predicated region
    $region30: #{multi_head_attention.1} parent=1 // pred_check
      _
    $region31: #{multi_head_attention.1} parent=1 // pred_check_branch
      %404 = sbr.rel (0) target = $region33
    $region32: #{multi_head_attention.1} parent=1 // pred_region
      %406 = dma.done [#allocation5], 64
    $region33: #{multi_head_attention.1} parent=1 // pred_fallthru
      _
    %407 = vsyncpa [#allocation3], 1
    %408 = vsyncpa [#allocation5], 1

</llo_original>
